<compile_context>
chip_gen: v7x
topology: tpu7x:2x2x1
jax: 0.10.0
libtpu: 0.0.40
codegen_flags: <defaults>
</compile_context>

<pallas_src>
import functools
import math

import numpy as np
import jax
import jax.numpy as jnp
from jax import lax
from jax.experimental import pallas as pl
from jax.experimental.pallas import tpu as pltpu

NCORES = 2      # leading "parallel" grid axis -> 2x on v7x megacore
LANES = 512     # particles per inner row (lane-dense, multiple of 128)


def _surface_density_kernel(x_ref, y_ref, m_ref, out_ref, *, r_min, dr):
    # x_ref/y_ref/m_ref: (rows, LANES); out_ref: (b_pad, LANES) resident acc.
    step = pl.program_id(1)

    @pl.when(step == 0)
    def _():
        out_ref[...] = jnp.zeros_like(out_ref)

    rows = x_ref.shape[0]
    b_pad, lanes = out_ref.shape
    # bin index per sublane row (constant, hoisted out of the inner loop)
    bins = lax.broadcasted_iota(jnp.int32, (b_pad, lanes), 0)

    def body(r, acc):
        x = x_ref[pl.ds(r, 1), :]                         # (1, lanes)
        y = y_ref[pl.ds(r, 1), :]
        m = m_ref[pl.ds(r, 1), :]
        r_cyl = jnp.sqrt(x * x + y * y)
        # same formula as the reference ((r - r_min) / dr) to avoid any
        # bin-edge disagreement from a precomputed reciprocal.
        idx = jnp.floor((r_cyl - r_min) / dr).astype(jnp.int32)   # (1, lanes)
        # No explicit range mask needed: idx < 0 or idx >= b_pad matches no
        # bin row, and r_bins <= idx < b_pad lands in padded rows that the
        # wrapper discards; zero-mass padding particles contribute nothing.
        return acc + jnp.where(idx == bins, m, 0.0)       # (b_pad, lanes)

    out_ref[...] = lax.fori_loop(0, rows, body, out_ref[...], unroll=True)


def surface_density_pallas(positions, masses, r_range=(0.0, 10.0), r_bins=20,
                           rows_per_tile=32):
    """positions: (N, 3) float32, masses: (N,) float32 -> (r_bins,) float32."""
    n = positions.shape[0]
    r_min = float(r_range[0])
    dr = (float(r_range[1]) - r_min) / r_bins
    b_pad = max(8, -(-r_bins // 8) * 8)          # bins padded onto sublanes

    # split x / y (avoids a lane-sparse (N, 2) input block)
    x = positions[:, 0].astype(jnp.float32)
    y = positions[:, 1].astype(jnp.float32)
    m = masses.astype(jnp.float32)

    # shrink the tile for small N, keep it a multiple of 8 sublanes
    rows_needed = max(1, -(-n // (NCORES * LANES)))
    rows_per_tile = max(8, min(rows_per_tile, -(-rows_needed // 8) * 8))
    steps = -(-rows_needed // rows_per_tile)
    rows_per_core = steps * rows_per_tile
    n_pad = NCORES * rows_per_core * LANES

    def pack(a):
        return jnp.pad(a, (0, n_pad - n)).reshape(NCORES, rows_per_core, LANES)

    xk, yk, mk = pack(x), pack(y), pack(m)

    kernel = functools.partial(_surface_density_kernel, r_min=r_min, dr=dr)

    part_spec = pl.BlockSpec((None, rows_per_tile, LANES),
                             lambda c, i: (c, i, 0))
    hist = pl.pallas_call(
        kernel,
        out_shape=jax.ShapeDtypeStruct((NCORES, b_pad, LANES), jnp.float32),
        grid_spec=pltpu.PrefetchScalarGridSpec(
            num_scalar_prefetch=0,
            grid=(NCORES, steps),
            in_specs=[part_spec, part_spec, part_spec],
            out_specs=pl.BlockSpec((None, b_pad, LANES),
                                   lambda c, i: (c, 0, 0)),
        ),
        compiler_params=pltpu.CompilerParams(
            dimension_semantics=("parallel", "arbitrary")),
    )(xk, yk, mk)

    # cross-core + cross-lane reduction, drop padded bins, divide by area here
    mass_in_bin = jnp.sum(hist, axis=(0, 2))[:r_bins]

    redge = r_min + jnp.arange(r_bins + 1, dtype=jnp.float32) * dr
    area = math.pi * (redge[1:] ** 2 - redge[:-1] ** 2)
    return mass_in_bin / area


def surface_density_ref(positions, masses, r_range=(0.0, 10.0), r_bins=20):
    """Pure-JAX reference matching the PyTorch forward."""
    r_min = float(r_range[0])
    dr = (float(r_range[1]) - float(r_range[0])) / r_bins
    redge = r_min + jnp.arange(r_bins + 1, dtype=jnp.float32) * dr
    area = math.pi * (redge[1:] ** 2 - redge[:-1] ** 2)
    r_cyl = jnp.sqrt(positions[:, 0] ** 2 + positions[:, 1] ** 2)
    i = jnp.floor((r_cyl - r_min) / dr).astype(jnp.int32)
    gd = (i >= 0) & (i < r_bins)
    mass_in_bin = jnp.zeros((r_bins,), jnp.float32).at[
        jnp.where(gd, i, 0)].add(jnp.where(gd, masses, 0.0))
    return mass_in_bin / area


if __name__ == "__main__":
    key = jax.random.PRNGKey(0)
    k1, k2 = jax.random.split(key)
    n_particles = 1000
    positions = jax.random.uniform(k1, (n_particles, 3), jnp.float32,
                                   minval=-12.0, maxval=12.0)
    masses = jax.random.uniform(k2, (n_particles,), jnp.float32,
                                minval=0.1, maxval=1.0)

    out = surface_density_pallas(positions, masses, r_range=(0.0, 10.0),
                                 r_bins=20)
    out = jax.block_until_ready(out)

    ref = surface_density_ref(positions, masses, r_range=(0.0, 10.0), r_bins=20)
    np.testing.assert_allclose(np.asarray(out), np.asarray(ref),
                               rtol=1e-5, atol=1e-6)
    print("KERNEL_OK")
</pallas_src>

<mosaic_0001>
module attributes {stable_mosaic.version = 11 : i64} {
  func.func @_surface_density_kernel(%arg0: i32, %arg1: i32, %arg2: memref<1x8x512xf32, #tpu.memory_space<vmem>>, %arg3: memref<1x8x512xf32, #tpu.memory_space<vmem>>, %arg4: memref<1x8x512xf32, #tpu.memory_space<vmem>>, %arg5: memref<1x24x512xf32, #tpu.memory_space<vmem>>) attributes {dimension_semantics = [#tpu.dimension_semantics<parallel>, #tpu.dimension_semantics<arbitrary>], iteration_bounds = array<i64: 2, 1>, scalar_prefetch = 0 : i64, scratch_operands = 0 : i64, tpu.core_type = #tpu.core_type<tc>, window_params = [{transform_indices = @transform_0, window_bounds = array<i64: 1, 8, 512>}, {transform_indices = @transform_1, window_bounds = array<i64: 1, 8, 512>}, {transform_indices = @transform_2, window_bounds = array<i64: 1, 8, 512>}, {transform_indices = @transform_3, window_bounds = array<i64: 1, 24, 512>}]} {
    %c0_i32 = arith.constant 0 : i32
    %0 = arith.cmpi eq, %arg1, %c0_i32 : i32
    %1 = arith.extui %0 : i1 to i32
    %c0_i32_0 = arith.constant 0 : i32
    %2 = arith.cmpi ne, %1, %c0_i32_0 : i32
    scf.if %2 {
      %cst_78 = arith.constant 0.000000e+00 : f32
      %217 = vector.broadcast %cst_78 : f32 to vector<24x512xf32>
      %c0_79 = arith.constant 0 : index
      %c0_80 = arith.constant 0 : index
      %c0_81 = arith.constant 0 : index
      %218 = vector.load %arg5[%c0_79, %c0_80, %c0_81] : memref<1x24x512xf32, #tpu.memory_space<vmem>>, vector<1x24x512xf32>
      %219 = vector.shape_cast %218 : vector<1x24x512xf32> to vector<24x512xf32>
      %220 = vector.shape_cast %217 : vector<24x512xf32> to vector<1x24x512xf32>
      tpu.vector_store %arg5[%c0_79, %c0_80, %c0_81], %220 {strides = array<i32>} : memref<1x24x512xf32, #tpu.memory_space<vmem>>, vector<1x24x512xf32>,
    } else {
    }
    %3 = tpu.iota {dimensions = array<i32: 0>} : vector<24x512xi32>
    %c0 = arith.constant 0 : index
    %c0_1 = arith.constant 0 : index
    %c0_2 = arith.constant 0 : index
    %4 = vector.load %arg5[%c0, %c0_1, %c0_2] : memref<1x24x512xf32, #tpu.memory_space<vmem>>, vector<1x24x512xf32>
    %5 = vector.shape_cast %4 : vector<1x24x512xf32> to vector<24x512xf32>
    %c0_i32_3 = arith.constant 0 : i32
    %c0_4 = arith.constant 0 : index
    %6 = arith.index_cast %c0_i32_3 : i32 to index
    %c0_5 = arith.constant 0 : index
    %7 = vector.load %arg2[%c0_4, %6, %c0_5] : memref<1x8x512xf32, #tpu.memory_space<vmem>>, vector<1x1x512xf32>
    %8 = vector.shape_cast %7 : vector<1x1x512xf32> to vector<1x512xf32>
    %c0_6 = arith.constant 0 : index
    %9 = arith.index_cast %c0_i32_3 : i32 to index
    %c0_7 = arith.constant 0 : index
    %10 = vector.load %arg3[%c0_6, %9, %c0_7] : memref<1x8x512xf32, #tpu.memory_space<vmem>>, vector<1x1x512xf32>
    %11 = vector.shape_cast %10 : vector<1x1x512xf32> to vector<1x512xf32>
    %c0_8 = arith.constant 0 : index
    %12 = arith.index_cast %c0_i32_3 : i32 to index
    %c0_9 = arith.constant 0 : index
    %13 = vector.load %arg4[%c0_8, %12, %c0_9] : memref<1x8x512xf32, #tpu.memory_space<vmem>>, vector<1x1x512xf32>
    %14 = vector.shape_cast %13 : vector<1x1x512xf32> to vector<1x512xf32>
    %15 = arith.mulf %8, %8 : vector<1x512xf32>
    %16 = arith.mulf %11, %11 : vector<1x512xf32>
    %17 = arith.addf %15, %16 : vector<1x512xf32>
    %18 = math.sqrt %17 : vector<1x512xf32>
    %cst = arith.constant 0.000000e+00 : f32
    %19 = vector.broadcast %cst : f32 to vector<1x512xf32>
    %20 = arith.subf %18, %19 : vector<1x512xf32>
    %cst_10 = arith.constant 5.000000e-01 : f32
    %21 = vector.broadcast %cst_10 : f32 to vector<1x512xf32>
    %22 = arith.divf %20, %21 : vector<1x512xf32>
    %23 = math.floor %22 : vector<1x512xf32>
    %24 = arith.fptosi %23 : vector<1x512xf32> to vector<1x512xi32>
    %25 = vector.broadcast %24 : vector<1x512xi32> to vector<24x512xi32>
    %26 = arith.cmpi eq, %25, %3 : vector<24x512xi32>
    %cst_11 = arith.constant 0.000000e+00 : f32
    %27 = vector.shape_cast %14 : vector<1x512xf32> to vector<1x512xf32>
    %28 = vector.broadcast %27 : vector<1x512xf32> to vector<24x512xf32>
    %29 = vector.broadcast %cst_11 : f32 to vector<24x512xf32>
    %30 = arith.select %26, %28, %29 : vector<24x512xi1>, vector<24x512xf32>
    %31 = arith.addf %5, %30 : vector<24x512xf32>
    %c1_i32 = arith.constant 1 : i32
    %c0_12 = arith.constant 0 : index
    %32 = arith.index_cast %c1_i32 : i32 to index
    %c0_13 = arith.constant 0 : index
    %33 = vector.load %arg2[%c0_12, %32, %c0_13] : memref<1x8x512xf32, #tpu.memory_space<vmem>>, vector<1x1x512xf32>
    %34 = vector.shape_cast %33 : vector<1x1x512xf32> to vector<1x512xf32>
    %c0_14 = arith.constant 0 : index
    %35 = arith.index_cast %c1_i32 : i32 to index
    %c0_15 = arith.constant 0 : index
    %36 = vector.load %arg3[%c0_14, %35, %c0_15] : memref<1x8x512xf32, #tpu.memory_space<vmem>>, vector<1x1x512xf32>
    %37 = vector.shape_cast %36 : vector<1x1x512xf32> to vector<1x512xf32>
    %c0_16 = arith.constant 0 : index
    %38 = arith.index_cast %c1_i32 : i32 to index
    %c0_17 = arith.constant 0 : index
    %39 = vector.load %arg4[%c0_16, %38, %c0_17] : memref<1x8x512xf32, #tpu.memory_space<vmem>>, vector<1x1x512xf32>
    %40 = vector.shape_cast %39 : vector<1x1x512xf32> to vector<1x512xf32>
    %41 = arith.mulf %34, %34 : vector<1x512xf32>
    %42 = arith.mulf %37, %37 : vector<1x512xf32>
    %43 = arith.addf %41, %42 : vector<1x512xf32>
    %44 = math.sqrt %43 : vector<1x512xf32>
    %cst_18 = arith.constant 0.000000e+00 : f32
    %45 = vector.broadcast %cst_18 : f32 to vector<1x512xf32>
    %46 = arith.subf %44, %45 : vector<1x512xf32>
    %cst_19 = arith.constant 5.000000e-01 : f32
    %47 = vector.broadcast %cst_19 : f32 to vector<1x512xf32>
    %48 = arith.divf %46, %47 : vector<1x512xf32>
    %49 = math.floor %48 : vector<1x512xf32>
    %50 = arith.fptosi %49 : vector<1x512xf32> to vector<1x512xi32>
    %51 = vector.broadcast %50 : vector<1x512xi32> to vector<24x512xi32>
    %52 = arith.cmpi eq, %51, %3 : vector<24x512xi32>
    %cst_20 = arith.constant 0.000000e+00 : f32
    %53 = vector.shape_cast %40 : vector<1x512xf32> to vector<1x512xf32>
    %54 = vector.broadcast %53 : vector<1x512xf32> to vector<24x512xf32>
    %55 = vector.broadcast %cst_20 : f32 to vector<24x512xf32>
    %56 = arith.select %52, %54, %55 : vector<24x512xi1>, vector<24x512xf32>
    %57 = arith.addf %31, %56 : vector<24x512xf32>
    %c2_i32 = arith.constant 2 : i32
    %c0_21 = arith.constant 0 : index
    %58 = arith.index_cast %c2_i32 : i32 to index
    %c0_22 = arith.constant 0 : index
    %59 = vector.load %arg2[%c0_21, %58, %c0_22] : memref<1x8x512xf32, #tpu.memory_space<vmem>>, vector<1x1x512xf32>
    %60 = vector.shape_cast %59 : vector<1x1x512xf32> to vector<1x512xf32>
    %c0_23 = arith.constant 0 : index
    %61 = arith.index_cast %c2_i32 : i32 to index
    %c0_24 = arith.constant 0 : index
    %62 = vector.load %arg3[%c0_23, %61, %c0_24] : memref<1x8x512xf32, #tpu.memory_space<vmem>>, vector<1x1x512xf32>
    %63 = vector.shape_cast %62 : vector<1x1x512xf32> to vector<1x512xf32>
    %c0_25 = arith.constant 0 : index
    %64 = arith.index_cast %c2_i32 : i32 to index
    %c0_26 = arith.constant 0 : index
    %65 = vector.load %arg4[%c0_25, %64, %c0_26] : memref<1x8x512xf32, #tpu.memory_space<vmem>>, vector<1x1x512xf32>
    %66 = vector.shape_cast %65 : vector<1x1x512xf32> to vector<1x512xf32>
    %67 = arith.mulf %60, %60 : vector<1x512xf32>
    %68 = arith.mulf %63, %63 : vector<1x512xf32>
    %69 = arith.addf %67, %68 : vector<1x512xf32>
    %70 = math.sqrt %69 : vector<1x512xf32>
    %cst_27 = arith.constant 0.000000e+00 : f32
    %71 = vector.broadcast %cst_27 : f32 to vector<1x512xf32>
    %72 = arith.subf %70, %71 : vector<1x512xf32>
    %cst_28 = arith.constant 5.000000e-01 : f32
    %73 = vector.broadcast %cst_28 : f32 to vector<1x512xf32>
    %74 = arith.divf %72, %73 : vector<1x512xf32>
    %75 = math.floor %74 : vector<1x512xf32>
    %76 = arith.fptosi %75 : vector<1x512xf32> to vector<1x512xi32>
    %77 = vector.broadcast %76 : vector<1x512xi32> to vector<24x512xi32>
    %78 = arith.cmpi eq, %77, %3 : vector<24x512xi32>
    %cst_29 = arith.constant 0.000000e+00 : f32
    %79 = vector.shape_cast %66 : vector<1x512xf32> to vector<1x512xf32>
    %80 = vector.broadcast %79 : vector<1x512xf32> to vector<24x512xf32>
    %81 = vector.broadcast %cst_29 : f32 to vector<24x512xf32>
    %82 = arith.select %78, %80, %81 : vector<24x512xi1>, vector<24x512xf32>
    %83 = arith.addf %57, %82 : vector<24x512xf32>
    %c3_i32 = arith.constant 3 : i32
    %c0_30 = arith.constant 0 : index
    %84 = arith.index_cast %c3_i32 : i32 to index
    %c0_31 = arith.constant 0 : index
    %85 = vector.load %arg2[%c0_30, %84, %c0_31] : memref<1x8x512xf32, #tpu.memory_space<vmem>>, vector<1x1x512xf32>
    %86 = vector.shape_cast %85 : vector<1x1x512xf32> to vector<1x512xf32>
    %c0_32 = arith.constant 0 : index
    %87 = arith.index_cast %c3_i32 : i32 to index
    %c0_33 = arith.constant 0 : index
    %88 = vector.load %arg3[%c0_32, %87, %c0_33] : memref<1x8x512xf32, #tpu.memory_space<vmem>>, vector<1x1x512xf32>
    %89 = vector.shape_cast %88 : vector<1x1x512xf32> to vector<1x512xf32>
    %c0_34 = arith.constant 0 : index
    %90 = arith.index_cast %c3_i32 : i32 to index
    %c0_35 = arith.constant 0 : index
    %91 = vector.load %arg4[%c0_34, %90, %c0_35] : memref<1x8x512xf32, #tpu.memory_space<vmem>>, vector<1x1x512xf32>
    %92 = vector.shape_cast %91 : vector<1x1x512xf32> to vector<1x512xf32>
    %93 = arith.mulf %86, %86 : vector<1x512xf32>
    %94 = arith.mulf %89, %89 : vector<1x512xf32>
    %95 = arith.addf %93, %94 : vector<1x512xf32>
    %96 = math.sqrt %95 : vector<1x512xf32>
    %cst_36 = arith.constant 0.000000e+00 : f32
    %97 = vector.broadcast %cst_36 : f32 to vector<1x512xf32>
    %98 = arith.subf %96, %97 : vector<1x512xf32>
    %cst_37 = arith.constant 5.000000e-01 : f32
    %99 = vector.broadcast %cst_37 : f32 to vector<1x512xf32>
    %100 = arith.divf %98, %99 : vector<1x512xf32>
    %101 = math.floor %100 : vector<1x512xf32>
    %102 = arith.fptosi %101 : vector<1x512xf32> to vector<1x512xi32>
    %103 = vector.broadcast %102 : vector<1x512xi32> to vector<24x512xi32>
    %104 = arith.cmpi eq, %103, %3 : vector<24x512xi32>
    %cst_38 = arith.constant 0.000000e+00 : f32
    %105 = vector.shape_cast %92 : vector<1x512xf32> to vector<1x512xf32>
    %106 = vector.broadcast %105 : vector<1x512xf32> to vector<24x512xf32>
    %107 = vector.broadcast %cst_38 : f32 to vector<24x512xf32>
    %108 = arith.select %104, %106, %107 : vector<24x512xi1>, vector<24x512xf32>
    %109 = arith.addf %83, %108 : vector<24x512xf32>
    %c4_i32 = arith.constant 4 : i32
    %c0_39 = arith.constant 0 : index
    %110 = arith.index_cast %c4_i32 : i32 to index
    %c0_40 = arith.constant 0 : index
    %111 = vector.load %arg2[%c0_39, %110, %c0_40] : memref<1x8x512xf32, #tpu.memory_space<vmem>>, vector<1x1x512xf32>
    %112 = vector.shape_cast %111 : vector<1x1x512xf32> to vector<1x512xf32>
    %c0_41 = arith.constant 0 : index
    %113 = arith.index_cast %c4_i32 : i32 to index
    %c0_42 = arith.constant 0 : index
    %114 = vector.load %arg3[%c0_41, %113, %c0_42] : memref<1x8x512xf32, #tpu.memory_space<vmem>>, vector<1x1x512xf32>
    %115 = vector.shape_cast %114 : vector<1x1x512xf32> to vector<1x512xf32>
    %c0_43 = arith.constant 0 : index
    %116 = arith.index_cast %c4_i32 : i32 to index
    %c0_44 = arith.constant 0 : index
    %117 = vector.load %arg4[%c0_43, %116, %c0_44] : memref<1x8x512xf32, #tpu.memory_space<vmem>>, vector<1x1x512xf32>
    %118 = vector.shape_cast %117 : vector<1x1x512xf32> to vector<1x512xf32>
    %119 = arith.mulf %112, %112 : vector<1x512xf32>
    %120 = arith.mulf %115, %115 : vector<1x512xf32>
    %121 = arith.addf %119, %120 : vector<1x512xf32>
    %122 = math.sqrt %121 : vector<1x512xf32>
    %cst_45 = arith.constant 0.000000e+00 : f32
    %123 = vector.broadcast %cst_45 : f32 to vector<1x512xf32>
    %124 = arith.subf %122, %123 : vector<1x512xf32>
    %cst_46 = arith.constant 5.000000e-01 : f32
    %125 = vector.broadcast %cst_46 : f32 to vector<1x512xf32>
    %126 = arith.divf %124, %125 : vector<1x512xf32>
    %127 = math.floor %126 : vector<1x512xf32>
    %128 = arith.fptosi %127 : vector<1x512xf32> to vector<1x512xi32>
    %129 = vector.broadcast %128 : vector<1x512xi32> to vector<24x512xi32>
    %130 = arith.cmpi eq, %129, %3 : vector<24x512xi32>
    %cst_47 = arith.constant 0.000000e+00 : f32
    %131 = vector.shape_cast %118 : vector<1x512xf32> to vector<1x512xf32>
    %132 = vector.broadcast %131 : vector<1x512xf32> to vector<24x512xf32>
    %133 = vector.broadcast %cst_47 : f32 to vector<24x512xf32>
    %134 = arith.select %130, %132, %133 : vector<24x512xi1>, vector<24x512xf32>
    %135 = arith.addf %109, %134 : vector<24x512xf32>
    %c5_i32 = arith.constant 5 : i32
    %c0_48 = arith.constant 0 : index
    %136 = arith.index_cast %c5_i32 : i32 to index
    %c0_49 = arith.constant 0 : index
    %137 = vector.load %arg2[%c0_48, %136, %c0_49] : memref<1x8x512xf32, #tpu.memory_space<vmem>>, vector<1x1x512xf32>
    %138 = vector.shape_cast %137 : vector<1x1x512xf32> to vector<1x512xf32>
    %c0_50 = arith.constant 0 : index
    %139 = arith.index_cast %c5_i32 : i32 to index
    %c0_51 = arith.constant 0 : index
    %140 = vector.load %arg3[%c0_50, %139, %c0_51] : memref<1x8x512xf32, #tpu.memory_space<vmem>>, vector<1x1x512xf32>
    %141 = vector.shape_cast %140 : vector<1x1x512xf32> to vector<1x512xf32>
    %c0_52 = arith.constant 0 : index
    %142 = arith.index_cast %c5_i32 : i32 to index
    %c0_53 = arith.constant 0 : index
    %143 = vector.load %arg4[%c0_52, %142, %c0_53] : memref<1x8x512xf32, #tpu.memory_space<vmem>>, vector<1x1x512xf32>
    %144 = vector.shape_cast %143 : vector<1x1x512xf32> to vector<1x512xf32>
    %145 = arith.mulf %138, %138 : vector<1x512xf32>
    %146 = arith.mulf %141, %141 : vector<1x512xf32>
    %147 = arith.addf %145, %146 : vector<1x512xf32>
    %148 = math.sqrt %147 : vector<1x512xf32>
    %cst_54 = arith.constant 0.000000e+00 : f32
    %149 = vector.broadcast %cst_54 : f32 to vector<1x512xf32>
    %150 = arith.subf %148, %149 : vector<1x512xf32>
    %cst_55 = arith.constant 5.000000e-01 : f32
    %151 = vector.broadcast %cst_55 : f32 to vector<1x512xf32>
    %152 = arith.divf %150, %151 : vector<1x512xf32>
    %153 = math.floor %152 : vector<1x512xf32>
    %154 = arith.fptosi %153 : vector<1x512xf32> to vector<1x512xi32>
    %155 = vector.broadcast %154 : vector<1x512xi32> to vector<24x512xi32>
    %156 = arith.cmpi eq, %155, %3 : vector<24x512xi32>
    %cst_56 = arith.constant 0.000000e+00 : f32
    %157 = vector.shape_cast %144 : vector<1x512xf32> to vector<1x512xf32>
    %158 = vector.broadcast %157 : vector<1x512xf32> to vector<24x512xf32>
    %159 = vector.broadcast %cst_56 : f32 to vector<24x512xf32>
    %160 = arith.select %156, %158, %159 : vector<24x512xi1>, vector<24x512xf32>
    %161 = arith.addf %135, %160 : vector<24x512xf32>
    %c6_i32 = arith.constant 6 : i32
    %c0_57 = arith.constant 0 : index
    %162 = arith.index_cast %c6_i32 : i32 to index
    %c0_58 = arith.constant 0 : index
    %163 = vector.load %arg2[%c0_57, %162, %c0_58] : memref<1x8x512xf32, #tpu.memory_space<vmem>>, vector<1x1x512xf32>
    %164 = vector.shape_cast %163 : vector<1x1x512xf32> to vector<1x512xf32>
    %c0_59 = arith.constant 0 : index
    %165 = arith.index_cast %c6_i32 : i32 to index
    %c0_60 = arith.constant 0 : index
    %166 = vector.load %arg3[%c0_59, %165, %c0_60] : memref<1x8x512xf32, #tpu.memory_space<vmem>>, vector<1x1x512xf32>
    %167 = vector.shape_cast %166 : vector<1x1x512xf32> to vector<1x512xf32>
    %c0_61 = arith.constant 0 : index
    %168 = arith.index_cast %c6_i32 : i32 to index
    %c0_62 = arith.constant 0 : index
    %169 = vector.load %arg4[%c0_61, %168, %c0_62] : memref<1x8x512xf32, #tpu.memory_space<vmem>>, vector<1x1x512xf32>
    %170 = vector.shape_cast %169 : vector<1x1x512xf32> to vector<1x512xf32>
    %171 = arith.mulf %164, %164 : vector<1x512xf32>
    %172 = arith.mulf %167, %167 : vector<1x512xf32>
    %173 = arith.addf %171, %172 : vector<1x512xf32>
    %174 = math.sqrt %173 : vector<1x512xf32>
    %cst_63 = arith.constant 0.000000e+00 : f32
    %175 = vector.broadcast %cst_63 : f32 to vector<1x512xf32>
    %176 = arith.subf %174, %175 : vector<1x512xf32>
    %cst_64 = arith.constant 5.000000e-01 : f32
    %177 = vector.broadcast %cst_64 : f32 to vector<1x512xf32>
    %178 = arith.divf %176, %177 : vector<1x512xf32>
    %179 = math.floor %178 : vector<1x512xf32>
    %180 = arith.fptosi %179 : vector<1x512xf32> to vector<1x512xi32>
    %181 = vector.broadcast %180 : vector<1x512xi32> to vector<24x512xi32>
    %182 = arith.cmpi eq, %181, %3 : vector<24x512xi32>
    %cst_65 = arith.constant 0.000000e+00 : f32
    %183 = vector.shape_cast %170 : vector<1x512xf32> to vector<1x512xf32>
    %184 = vector.broadcast %183 : vector<1x512xf32> to vector<24x512xf32>
    %185 = vector.broadcast %cst_65 : f32 to vector<24x512xf32>
    %186 = arith.select %182, %184, %185 : vector<24x512xi1>, vector<24x512xf32>
    %187 = arith.addf %161, %186 : vector<24x512xf32>
    %c7_i32 = arith.constant 7 : i32
    %c0_66 = arith.constant 0 : index
    %188 = arith.index_cast %c7_i32 : i32 to index
    %c0_67 = arith.constant 0 : index
    %189 = vector.load %arg2[%c0_66, %188, %c0_67] : memref<1x8x512xf32, #tpu.memory_space<vmem>>, vector<1x1x512xf32>
    %190 = vector.shape_cast %189 : vector<1x1x512xf32> to vector<1x512xf32>
    %c0_68 = arith.constant 0 : index
    %191 = arith.index_cast %c7_i32 : i32 to index
    %c0_69 = arith.constant 0 : index
    %192 = vector.load %arg3[%c0_68, %191, %c0_69] : memref<1x8x512xf32, #tpu.memory_space<vmem>>, vector<1x1x512xf32>
    %193 = vector.shape_cast %192 : vector<1x1x512xf32> to vector<1x512xf32>
    %c0_70 = arith.constant 0 : index
    %194 = arith.index_cast %c7_i32 : i32 to index
    %c0_71 = arith.constant 0 : index
    %195 = vector.load %arg4[%c0_70, %194, %c0_71] : memref<1x8x512xf32, #tpu.memory_space<vmem>>, vector<1x1x512xf32>
    %196 = vector.shape_cast %195 : vector<1x1x512xf32> to vector<1x512xf32>
    %197 = arith.mulf %190, %190 : vector<1x512xf32>
    %198 = arith.mulf %193, %193 : vector<1x512xf32>
    %199 = arith.addf %197, %198 : vector<1x512xf32>
    %200 = math.sqrt %199 : vector<1x512xf32>
    %cst_72 = arith.constant 0.000000e+00 : f32
    %201 = vector.broadcast %cst_72 : f32 to vector<1x512xf32>
    %202 = arith.subf %200, %201 : vector<1x512xf32>
    %cst_73 = arith.constant 5.000000e-01 : f32
    %203 = vector.broadcast %cst_73 : f32 to vector<1x512xf32>
    %204 = arith.divf %202, %203 : vector<1x512xf32>
    %205 = math.floor %204 : vector<1x512xf32>
    %206 = arith.fptosi %205 : vector<1x512xf32> to vector<1x512xi32>
    %207 = vector.broadcast %206 : vector<1x512xi32> to vector<24x512xi32>
    %208 = arith.cmpi eq, %207, %3 : vector<24x512xi32>
    %cst_74 = arith.constant 0.000000e+00 : f32
    %209 = vector.shape_cast %196 : vector<1x512xf32> to vector<1x512xf32>
    %210 = vector.broadcast %209 : vector<1x512xf32> to vector<24x512xf32>
    %211 = vector.broadcast %cst_74 : f32 to vector<24x512xf32>
    %212 = arith.select %208, %210, %211 : vector<24x512xi1>, vector<24x512xf32>
    %213 = arith.addf %187, %212 : vector<24x512xf32>
    %c8_i32 = arith.constant 8 : i32
    %c0_75 = arith.constant 0 : index
    %c0_76 = arith.constant 0 : index
    %c0_77 = arith.constant 0 : index
    %214 = vector.load %arg5[%c0_75, %c0_76, %c0_77] : memref<1x24x512xf32, #tpu.memory_space<vmem>>, vector<1x24x512xf32>
    %215 = vector.shape_cast %214 : vector<1x24x512xf32> to vector<24x512xf32>
    %216 = vector.shape_cast %213 : vector<24x512xf32> to vector<1x24x512xf32>
    tpu.vector_store %arg5[%c0_75, %c0_76, %c0_77], %216 {strides = array<i32>} : memref<1x24x512xf32, #tpu.memory_space<vmem>>, vector<1x24x512xf32>,
    return
  }
  func.func @transform_0(%arg0: i32, %arg1: i32) -> (i32, i32, i32) {
    %c0_i32 = arith.constant 0 : i32
    %c0_i32_0 = arith.constant 0 : i32
    return %arg0, %arg1, %c0_i32 : i32, i32, i32
  }
  func.func @transform_1(%arg0: i32, %arg1: i32) -> (i32, i32, i32) {
    %c0_i32 = arith.constant 0 : i32
    %c0_i32_0 = arith.constant 0 : i32
    return %arg0, %arg1, %c0_i32 : i32, i32, i32
  }
  func.func @transform_2(%arg0: i32, %arg1: i32) -> (i32, i32, i32) {
    %c0_i32 = arith.constant 0 : i32
    %c0_i32_0 = arith.constant 0 : i32
    return %arg0, %arg1, %c0_i32 : i32, i32, i32
  }
  func.func @transform_3(%arg0: i32, %arg1: i32) -> (i32, i32, i32) {
    %c0_i32 = arith.constant 0 : i32
    %c0_i32_0 = arith.constant 0 : i32
    %c0_i32_1 = arith.constant 0 : i32
    return %arg0, %c0_i32, %c0_i32_0 : i32, i32, i32
  }
}

</mosaic_0001>

<llo_original>
// kernel: tpu_custom_call.1
$region0: #{tpu_custom_call.1}
  #allocation0 [shape = 'u32[]', space=smem, size = 0x4, offset = 0x4, fixed_abs, tag = 'smem constant byte address 0x4 - core index']
  #allocation1 [shape = 'u32[144,128]{1,0:T(1,128)}', space=vmem, size = 0x12000, scoped, tag = 'internal scratch']
  %s0 = inlined_call_operand.hbm [shape: f32[2,8,512], index: 0, kind: input, shape index: {}]
  %s1 = inlined_call_operand.hbm [shape: f32[2,8,512], index: 1, kind: input, shape index: {}]
  %s2 = inlined_call_operand.hbm [shape: f32[2,8,512], index: 2, kind: input, shape index: {}]
  %s3 = inlined_call_operand.hbm [shape: f32[2,24,512], index: 3, kind: output, shape index: {}]
  %s4 = sld [smem:[#allocation0]]
  $region61: #{tpu_custom_call.1} parent=0
    _
  %s6 = ssub.s32 1, %s4
  %s7 = scalar_select 0, %s6, %s4
  $region1: #{tpu_custom_call.1} parent=0
    #allocation2 [shape = 'u8[32768]{0}', space=vmem, size = 0x8000, scoped, tag = 'input window, operand 0']
    #allocation3 [shape = 's32[2]{0}', space=sflag, size = 0x8, scoped, tag = 'scoped memory for tpu_custom_call.1']
    #allocation4 [shape = 's32[2]{0}', space=sflag, size = 0x8, scoped, tag = 'scoped memory for tpu_custom_call.1']
    #allocation5 [shape = 'u8[32768]{0}', space=vmem, size = 0x8000, scoped, tag = 'input window, operand 1']
    #allocation6 [shape = 's32[2]{0}', space=sflag, size = 0x8, scoped, tag = 'scoped memory for tpu_custom_call.1']
    #allocation7 [shape = 'u8[32768]{0}', space=vmem, size = 0x8000, scoped, tag = 'input window, operand 2']
    #allocation8 [shape = 'u8[98304]{0}', space=vmem, size = 0x18000, scoped, tag = 'output window, operand 0']
    %8 = vsyncpa [#allocation3], 0
    %s9 = scalar_lea.sflag [#allocation3], 1
    %10 = vsyncpa %s9, 0
    %11 = vsyncpa [#allocation6], 0
    %s12 = scalar_lea.sflag [#allocation6], 1
    %13 = vsyncpa %s12, 0
    %14 = vsyncpa [#allocation4], 0
    %s15 = scalar_lea.sflag [#allocation4], 1
    %16 = vsyncpa %s15, 0
    loop: start=0, step=1, limit=4
    $region2: #{tpu_custom_call.1} parent=1 // loop_pre_header
      _
    $region3: #{tpu_custom_call.1} parent=1 // loop_header
      %s18 = sphi 0, %s22
      %p19 = scmp.ge.s32.totalorder %s18, 4
      %s25 = sphi 0, %s37
      %s26 = sphi 0, %s33
      %s27 = sphi 0, %s25
      %s28 = sphi 0, %s26
      %s29 = sphi 0, %s27
      %s30 = sphi 0, %s28
      %s42 = sphi 0, %s44
      %s45 = sphi 0, %s42
      %s46 = sphi 0, %s45
      %s62 = sphi 0, %s46
      %s70 = sphi 0, %s72
      %s73 = sphi 0, %s70
      %s74 = sphi 0, %s73
      %s90 = sphi 0, %s74
      %s98 = sphi 0, %s100
      %s101 = sphi 0, %s98
      %s102 = sphi 0, %s101
      %s118 = sphi 0, %s102
      %s124 = sphi 0, %s126
      %s127 = sphi 0, %s124
      %s128 = sphi 0, %s127
      %s144 = sphi 0, %s128
    $region4: #{tpu_custom_call.1} parent=1 // loop_header_branch
      %21 = sbr.rel (%p19) target = $region8
    $region5: #{tpu_custom_call.1} parent=1 // loop_body
      %s23 = ssub.s32 %s18, 1
      %s24 = ssub.s32 %s18, 2
      %s31 = sadd.s32 1, %s26
      %p32 = scmp.ge.s32.totalorder %s31, 1
      %s33 = scalar_select %p32, 0, %s31
      %s34 = sadd.s32 1, %s25
      %s35 = scalar_select %p32, %s34, %s25
      %p36 = scmp.ge.s32.totalorder %s35, 2
      %s37 = scalar_select %p36, 0, %s35
      %s38 = ssub.s32 %s25, %s37
      %s39 = ssub.s32 %s26, %s33
      %s40 = sor.u32 %s38, %s39
      %p41 = scmp.eq.s32.totalorder %s40, 0
      %s43 = sadd.s32 %s42, 1
      %s44 = scalar_select %p41, %s42, %s43
      %p47 = pneg %p41
      %p48 = scmp.eq.s32.totalorder %s18, 1
      %p49 = por %p47, %p48
      %p50 = scmp.ne.s32.totalorder %s42, %s45
      %p51 = scmp.eq.s32.totalorder %s18, 0
      %p52 = por %p50, %p51
      %p53 = scmp.ne.s32.totalorder %s42, %s45
      %p54 = scmp.eq.s32.totalorder %s23, 1
      %p55 = por %p53, %p54
      %p56 = scmp.ne.s32.totalorder %s45, %s46
      %p57 = scmp.eq.s32.totalorder %s23, 0
      %p58 = por %p56, %p57
      %p59 = scmp.ne.s32.totalorder %s45, %s46
      %p60 = scmp.eq.s32.totalorder %s24, 1
      %p61 = por %p59, %p60
      %p63 = scmp.ne.s32.totalorder %s46, %s62
      %p64 = scmp.eq.s32.totalorder %s24, 0
      %p65 = por %p63, %p64
      %s66 = ssub.s32 %s25, %s37
      %s67 = ssub.s32 %s26, %s33
      %s68 = sor.u32 %s66, %s67
      %p69 = scmp.eq.s32.totalorder %s68, 0
      %s71 = sadd.s32 %s70, 1
      %s72 = scalar_select %p69, %s70, %s71
      %p75 = pneg %p69
      %p76 = scmp.eq.s32.totalorder %s18, 1
      %p77 = por %p75, %p76
      %p78 = scmp.ne.s32.totalorder %s70, %s73
      %p79 = scmp.eq.s32.totalorder %s18, 0
      %p80 = por %p78, %p79
      %p81 = scmp.ne.s32.totalorder %s70, %s73
      %p82 = scmp.eq.s32.totalorder %s23, 1
      %p83 = por %p81, %p82
      %p84 = scmp.ne.s32.totalorder %s73, %s74
      %p85 = scmp.eq.s32.totalorder %s23, 0
      %p86 = por %p84, %p85
      %p87 = scmp.ne.s32.totalorder %s73, %s74
      %p88 = scmp.eq.s32.totalorder %s24, 1
      %p89 = por %p87, %p88
      %p91 = scmp.ne.s32.totalorder %s74, %s90
      %p92 = scmp.eq.s32.totalorder %s24, 0
      %p93 = por %p91, %p92
      %s94 = ssub.s32 %s25, %s37
      %s95 = ssub.s32 %s26, %s33
      %s96 = sor.u32 %s94, %s95
      %p97 = scmp.eq.s32.totalorder %s96, 0
      %s99 = sadd.s32 %s98, 1
      %s100 = scalar_select %p97, %s98, %s99
      %p103 = pneg %p97
      %p104 = scmp.eq.s32.totalorder %s18, 1
      %p105 = por %p103, %p104
      %p106 = scmp.ne.s32.totalorder %s98, %s101
      %p107 = scmp.eq.s32.totalorder %s18, 0
      %p108 = por %p106, %p107
      %p109 = scmp.ne.s32.totalorder %s98, %s101
      %p110 = scmp.eq.s32.totalorder %s23, 1
      %p111 = por %p109, %p110
      %p112 = scmp.ne.s32.totalorder %s101, %s102
      %p113 = scmp.eq.s32.totalorder %s23, 0
      %p114 = por %p112, %p113
      %p115 = scmp.ne.s32.totalorder %s101, %s102
      %p116 = scmp.eq.s32.totalorder %s24, 1
      %p117 = por %p115, %p116
      %p119 = scmp.ne.s32.totalorder %s102, %s118
      %p120 = scmp.eq.s32.totalorder %s24, 0
      %p121 = por %p119, %p120
      %s122 = ssub.s32 %s25, %s37
      %p123 = scmp.eq.s32.totalorder %s122, 0
      %s125 = sadd.s32 %s124, 1
      %s126 = scalar_select %p123, %s124, %s125
      %p129 = pneg %p123
      %p130 = scmp.eq.s32.totalorder %s18, 1
      %p131 = por %p129, %p130
      %p132 = scmp.ne.s32.totalorder %s124, %s127
      %p133 = scmp.eq.s32.totalorder %s18, 0
      %p134 = por %p132, %p133
      %p135 = scmp.ne.s32.totalorder %s124, %s127
      %p136 = scmp.eq.s32.totalorder %s23, 1
      %p137 = por %p135, %p136
      %p138 = scmp.ne.s32.totalorder %s127, %s128
      %p139 = scmp.eq.s32.totalorder %s23, 0
      %p140 = por %p138, %p139
      %p141 = scmp.ne.s32.totalorder %s127, %s128
      %p142 = scmp.eq.s32.totalorder %s24, 1
      %p143 = por %p141, %p142
      %p145 = scmp.ne.s32.totalorder %s128, %s144
      %p146 = scmp.eq.s32.totalorder %s24, 0
      %p147 = por %p145, %p146
      %p148 = scmp.le.s32.totalorder 1, %s18
      %p149 = scmp.lt.s32.totalorder %s18, 3
      %p150 = pnand %p148, %p149
      %p151 = pneg %p150
      // Predicated region
      $region9: #{tpu_custom_call.1} parent=5 // pred_check
        _
      $region10: #{tpu_custom_call.1} parent=5 // pred_check_branch
        %153 = sbr.rel (%p150) target = $region12
      $region11: #{tpu_custom_call.1} parent=5 // pred_region
        %s154 = ssub.s32 %s18, 1
      $region12: #{tpu_custom_call.1} parent=5 // pred_fallthru
        _
      %p155 = scmp.lt.s32.totalorder %s18, 2
      // Predicated region
      $region13: #{tpu_custom_call.1} parent=5 // pred_check
        %p156 = pneg %p155
      $region14: #{tpu_custom_call.1} parent=5 // pred_check_branch
        %158 = sbr.rel (%p156) target = $region16
      $region15: #{tpu_custom_call.1} parent=5 // pred_region
        // Predicated region
        $region17: #{tpu_custom_call.1} parent=15 // pred_check
          %p159 = pneg %p52
        $region18: #{tpu_custom_call.1} parent=15 // pred_check_branch
          %161 = sbr.rel (%p159) target = $region20
        $region19: #{tpu_custom_call.1} parent=15 // pred_region
          %s162 = sand.u32 %s42, 1
          %s163 = scalar_lea.sflag [#allocation3], %s162
          %s164 = sand.u32 %s42, 1
          %s165 = smul.addr %s164, 32
          %s166 = scalar_lea.vmem [#allocation2], %s165
          %s168 = ssub.s32 512, 512
          %169 = vsyncadd %s163, %s168
          %s170 = smul.addr %s26, 4
          %s171 = smul.addr %s25, 4
          %s172 = sadd.s32 %s170, %s171
          %s173 = smul.addr %s172, 128
          %s174 = scalar_lea.hbm %s0, %s173
          %s176 = sshll.u32 %s166, 4
          %s177 = int_to_ptr.vmem [resolvable:$true] %s176
          %179 = dma.hbm_to_vmem [thread:$0]  %s174, 512, %s177, %s163
        $region20: #{tpu_custom_call.1} parent=15 // pred_fallthru
          _
        // Predicated region
        $region21: #{tpu_custom_call.1} parent=15 // pred_check
          %p180 = pneg %p80
        $region22: #{tpu_custom_call.1} parent=15 // pred_check_branch
          %182 = sbr.rel (%p180) target = $region24
        $region23: #{tpu_custom_call.1} parent=15 // pred_region
          %s183 = sand.u32 %s18, 1
          %s184 = scalar_lea.sflag [#allocation6], %s183
          %s185 = sand.u32 %s70, 1
          %s186 = smul.addr %s185, 32
          %s187 = scalar_lea.vmem [#allocation5], %s186
          %s189 = ssub.s32 512, 512
          %190 = vsyncadd %s184, %s189
          %s191 = smul.addr %s26, 4
          %s192 = smul.addr %s25, 4
          %s193 = sadd.s32 %s191, %s192
          %s194 = smul.addr %s193, 128
          %s195 = scalar_lea.hbm %s1, %s194
          %s197 = sshll.u32 %s187, 4
          %s198 = int_to_ptr.vmem [resolvable:$true] %s197
          %200 = dma.hbm_to_vmem [thread:$0]  %s195, 512, %s198, %s184
        $region24: #{tpu_custom_call.1} parent=15 // pred_fallthru
          _
        // Predicated region
        $region25: #{tpu_custom_call.1} parent=15 // pred_check
          %p201 = pneg %p108
        $region26: #{tpu_custom_call.1} parent=15 // pred_check_branch
          %203 = sbr.rel (%p201) target = $region28
        $region27: #{tpu_custom_call.1} parent=15 // pred_region
          %s204 = sand.u32 %s18, 1
          %s205 = scalar_lea.sflag [#allocation6], %s204
          %s206 = sand.u32 %s98, 1
          %s207 = smul.addr %s206, 32
          %s208 = scalar_lea.vmem [#allocation7], %s207
          %s210 = ssub.s32 512, 512
          %211 = vsyncadd %s205, %s210
          %s212 = smul.addr %s26, 4
          %s213 = smul.addr %s25, 4
          %s214 = sadd.s32 %s212, %s213
          %s215 = smul.addr %s214, 128
          %s216 = scalar_lea.hbm %s2, %s215
          %s218 = sshll.u32 %s208, 4
          %s219 = int_to_ptr.vmem [resolvable:$true] %s218
          %221 = dma.hbm_to_vmem [thread:$0]  %s216, 512, %s219, %s205
        $region28: #{tpu_custom_call.1} parent=15 // pred_fallthru
          _
      $region16: #{tpu_custom_call.1} parent=5 // pred_fallthru
        _
      %p222 = scmp.le.s32.totalorder 1, %s18
      %p223 = scmp.lt.s32.totalorder %s18, 3
      %p224 = pnand %p222, %p223
      %p225 = pneg %p224
      // Predicated region
      $region29: #{tpu_custom_call.1} parent=5 // pred_check
        _
      $region30: #{tpu_custom_call.1} parent=5 // pred_check_branch
        %227 = sbr.rel (%p224) target = $region32
      $region31: #{tpu_custom_call.1} parent=5 // pred_region
        %s228 = ssub.s32 %s18, 1
        %s229 = sand.u32 %s45, 1
        %s230 = scalar_lea.sflag [#allocation3], %s229
        %s231 = sand.u32 %s45, 1
        %s232 = smul.addr %s231, 32
        %s233 = scalar_lea.vmem [#allocation2], %s232
        // Predicated region
        $region33: #{tpu_custom_call.1} parent=31 // pred_check
          %p234 = pneg %p58
        $region34: #{tpu_custom_call.1} parent=31 // pred_check_branch
          %236 = sbr.rel (%p234) target = $region36
        $region35: #{tpu_custom_call.1} parent=31 // pred_region
          %237 = dma.done %s230, 512
        $region36: #{tpu_custom_call.1} parent=31 // pred_fallthru
          _
        %s238 = sand.u32 %s23, 1
        %s239 = scalar_lea.sflag [#allocation6], %s238
        %s240 = sand.u32 %s73, 1
        %s241 = smul.addr %s240, 32
        %s242 = scalar_lea.vmem [#allocation5], %s241
        // Predicated region
        $region37: #{tpu_custom_call.1} parent=31 // pred_check
          %p243 = pneg %p86
        $region38: #{tpu_custom_call.1} parent=31 // pred_check_branch
          %245 = sbr.rel (%p243) target = $region40
        $region39: #{tpu_custom_call.1} parent=31 // pred_region
          %246 = dma.done %s239, 512
        $region40: #{tpu_custom_call.1} parent=31 // pred_fallthru
          _
        %s247 = sand.u32 %s23, 1
        %s248 = scalar_lea.sflag [#allocation6], %s247
        %s249 = sand.u32 %s101, 1
        %s250 = smul.addr %s249, 32
        %s251 = scalar_lea.vmem [#allocation7], %s250
        // Predicated region
        $region41: #{tpu_custom_call.1} parent=31 // pred_check
          %p252 = pneg %p114
        $region42: #{tpu_custom_call.1} parent=31 // pred_check_branch
          %254 = sbr.rel (%p252) target = $region44
        $region43: #{tpu_custom_call.1} parent=31 // pred_region
          %255 = dma.done %s248, 512
        $region44: #{tpu_custom_call.1} parent=31 // pred_fallthru
          _
        %s256 = sand.u32 %s45, 1
        %s257 = scalar_lea.sflag [#allocation3], %s256
        %s258 = sand.u32 %s45, 1
        %s259 = smul.addr %s258, 32
        %s260 = scalar_lea.vmem [#allocation2], %s259
        %p261 = pneg %p58
        %p262 = pneg %p55
        %s263 = sand.u32 %s23, 1
        %s264 = scalar_lea.sflag [#allocation6], %s263
        %s265 = sand.u32 %s73, 1
        %s266 = smul.addr %s265, 32
        %s267 = scalar_lea.vmem [#allocation5], %s266
        %p268 = pneg %p86
        %p269 = pneg %p83
        %s270 = sand.u32 %s23, 1
        %s271 = scalar_lea.sflag [#allocation6], %s270
        %s272 = sand.u32 %s101, 1
        %s273 = smul.addr %s272, 32
        %s274 = scalar_lea.vmem [#allocation7], %s273
        %p275 = pneg %p114
        %p276 = pneg %p111
        %p277 = pneg %p140
        %p278 = pneg %p137
        %s279 = sand.u32 %s127, 1
        %s280 = scalar_lea.sflag [#allocation4], %s279
        %s281 = sand.u32 %s127, 1
        %s282 = smul.addr %s281, 96
        %s283 = scalar_lea.vmem [#allocation8], %s282
        %p284 = scmp.eq.s32.totalorder %s28, 0
        // Predicated region
        $region45: #{tpu_custom_call.1} parent=31 // pred_check
          %p285 = pneg %p284
        $region46: #{tpu_custom_call.1} parent=31 // pred_check_branch
          %287 = sbr.rel (%p285) target = $region48
        $region47: #{tpu_custom_call.1} parent=31 // pred_region
          %288 = vst [vmem:[%s283] sm:$0xff] 0.0
          %289 = vst [vmem:[%s283 + $0x8] sm:$0xff] 0.0
          %290 = vst [vmem:[%s283 + $0x10] sm:$0xff] 0.0
          %291 = vst [vmem:[%s283 + $0x18] sm:$0xff] 0.0
          %292 = vst [vmem:[%s283 + $0x20] sm:$0xff] 0.0
          %293 = vst [vmem:[%s283 + $0x28] sm:$0xff] 0.0
          %294 = vst [vmem:[%s283 + $0x30] sm:$0xff] 0.0
          %295 = vst [vmem:[%s283 + $0x38] sm:$0xff] 0.0
          %296 = vst [vmem:[%s283 + $0x40] sm:$0xff] 0.0
          %297 = vst [vmem:[%s283 + $0x48] sm:$0xff] 0.0
          %298 = vst [vmem:[%s283 + $0x50] sm:$0xff] 0.0
          %299 = vst [vmem:[%s283 + $0x58] sm:$0xff] 0.0
        $region48: #{tpu_custom_call.1} parent=31 // pred_fallthru
          _
        %v300 = vlaneseq
        %v301 = vshrl.u32 %v300, 7
        %v302 = vadd.s32 %v301, 8
        %v303 = vadd.s32 %v301, 16
        %v304 = vld [vmem:[%s283] sm:$0xff]
        %v305 = vld [vmem:[%s283 + $0x8] sm:$0xff]
        %v306 = vld [vmem:[%s283 + $0x10] sm:$0xff]
        %v307 = vld [vmem:[%s283 + $0x18] sm:$0xff]
        %v308 = vld [vmem:[%s283 + $0x20] sm:$0xff]
        %v309 = vld [vmem:[%s283 + $0x28] sm:$0xff]
        %v310 = vld [vmem:[%s283 + $0x30] sm:$0xff]
        %v311 = vld [vmem:[%s283 + $0x38] sm:$0xff]
        %v312 = vld [vmem:[%s283 + $0x40] sm:$0xff]
        %v313 = vld [vmem:[%s283 + $0x48] sm:$0xff]
        %v314 = vld [vmem:[%s283 + $0x50] sm:$0xff]
        %v315 = vld [vmem:[%s283 + $0x58] sm:$0xff]
        %v316 = vld [vmem:[%s233] ss:$8 sm:$0xf]
        %v317 = vld [vmem:[%s242] ss:$8 sm:$0xf]
        %v318 = vld [vmem:[%s251] ss:$8 sm:$0xf]
        %v319 = vmul.f32 %v316, %v316
        %v320 = vmul.f32 %v317, %v317
        %v321 = vadd.f32 %v319, %v320
        %v322 = vrsqrt.pop %v321
        %v323 = vmul.f32 %v321, %v322
        %vm324 = vcmp.eq.f32.partialorder %v321, inf
        %v325 = vsel %vm324, %v321, %v323
        %vm326 = vcmp.eq.f32.partialorder %v321, 0.0
        %v327 = vand.u32 %v321, 2147483648
        %v328 = vsel %vm326, %v327, %v325
        %v329 = vrcp.pop 0.5
        %v330 = vmul.f32 %v328, %v329
        %v331 = vfloor.f32 %v330
        %v332 = vcvt.f32.s32.to.zero.pseudo %v331
        %v333 = vlaneseq
        %v334 = vshrl.u32 %v333, 7
        %v335 = vsub.s32 0, %v334
        %v336 = vrot.slane %v332, %v335
        %v337 = vlaneseq
        %v338 = vshrl.u32 %v337, 7
        %v339 = vsub.s32 1, %v338
        %v340 = vrot.slane %v332, %v339
        %v341 = vlaneseq
        %v342 = vshrl.u32 %v341, 7
        %v343 = vsub.s32 2, %v342
        %v344 = vrot.slane %v332, %v343
        %v345 = vlaneseq
        %v346 = vshrl.u32 %v345, 7
        %v347 = vsub.s32 3, %v346
        %v348 = vrot.slane %v332, %v347
        %vm349 = vcmp.eq.s32.totalorder %v336, %v301
        %vm350 = vcmp.eq.s32.totalorder %v340, %v301
        %vm351 = vcmp.eq.s32.totalorder %v344, %v301
        %vm352 = vcmp.eq.s32.totalorder %v348, %v301
        %vm353 = vcmp.eq.s32.totalorder %v336, %v302
        %vm354 = vcmp.eq.s32.totalorder %v340, %v302
        %vm355 = vcmp.eq.s32.totalorder %v344, %v302
        %vm356 = vcmp.eq.s32.totalorder %v348, %v302
        %vm357 = vcmp.eq.s32.totalorder %v336, %v303
        %vm358 = vcmp.eq.s32.totalorder %v340, %v303
        %vm359 = vcmp.eq.s32.totalorder %v344, %v303
        %vm360 = vcmp.eq.s32.totalorder %v348, %v303
        %v362 = vlaneseq
        %v363 = vshrl.u32 %v362, 7
        %v364 = vsub.s32 0, %v363
        %v365 = vrot.slane %v318, %v364
        %v366 = vlaneseq
        %v367 = vshrl.u32 %v366, 7
        %v368 = vsub.s32 1, %v367
        %v369 = vrot.slane %v318, %v368
        %v370 = vlaneseq
        %v371 = vshrl.u32 %v370, 7
        %v372 = vsub.s32 2, %v371
        %v373 = vrot.slane %v318, %v372
        %v374 = vlaneseq
        %v375 = vshrl.u32 %v374, 7
        %v376 = vsub.s32 3, %v375
        %v377 = vrot.slane %v318, %v376
        %v382 = vsel %vm349, %v365, 0.0
        %v383 = vsel %vm350, %v369, 0.0
        %v384 = vsel %vm351, %v373, 0.0
        %v385 = vsel %vm352, %v377, 0.0
        %v386 = vsel %vm353, %v365, 0.0
        %v387 = vsel %vm354, %v369, 0.0
        %v388 = vsel %vm355, %v373, 0.0
        %v389 = vsel %vm356, %v377, 0.0
        %v390 = vsel %vm357, %v365, 0.0
        %v391 = vsel %vm358, %v369, 0.0
        %v392 = vsel %vm359, %v373, 0.0
        %v393 = vsel %vm360, %v377, 0.0
        %v394 = vadd.f32 %v304, %v382
        %v395 = vadd.f32 %v305, %v383
        %v396 = vadd.f32 %v306, %v384
        %v397 = vadd.f32 %v307, %v385
        %v398 = vadd.f32 %v308, %v386
        %v399 = vadd.f32 %v309, %v387
        %v400 = vadd.f32 %v310, %v388
        %v401 = vadd.f32 %v311, %v389
        %v402 = vadd.f32 %v312, %v390
        %v403 = vadd.f32 %v313, %v391
        %v404 = vadd.f32 %v314, %v392
        %v405 = vadd.f32 %v315, %v393
        %s406 = scalar_lea.vmem %s233, 1 [#allocation2]
        %v407 = vld [vmem:[%s406] ss:$8 sm:$0xf]
        %s408 = scalar_lea.vmem %s242, 1 [#allocation5]
        %v409 = vld [vmem:[%s408] ss:$8 sm:$0xf]
        %s410 = scalar_lea.vmem %s251, 1 [#allocation7]
        %v411 = vld [vmem:[%s410] ss:$8 sm:$0xf]
        %v412 = vmul.f32 %v407, %v407
        %v413 = vmul.f32 %v409, %v409
        %v414 = vadd.f32 %v412, %v413
        %v415 = vrsqrt.pop %v414
        %v416 = vmul.f32 %v414, %v415
        %vm417 = vcmp.eq.f32.partialorder %v414, inf
        %v418 = vsel %vm417, %v414, %v416
        %vm419 = vcmp.eq.f32.partialorder %v414, 0.0
        %v420 = vand.u32 %v414, 2147483648
        %v421 = vsel %vm419, %v420, %v418
        %v422 = vmul.f32 %v421, %v329
        %v423 = vfloor.f32 %v422
        %v424 = vcvt.f32.s32.to.zero.pseudo %v423
        %v425 = vlaneseq
        %v426 = vshrl.u32 %v425, 7
        %v427 = vsub.s32 0, %v426
        %v428 = vrot.slane %v424, %v427
        %v429 = vlaneseq
        %v430 = vshrl.u32 %v429, 7
        %v431 = vsub.s32 1, %v430
        %v432 = vrot.slane %v424, %v431
        %v433 = vlaneseq
        %v434 = vshrl.u32 %v433, 7
        %v435 = vsub.s32 2, %v434
        %v436 = vrot.slane %v424, %v435
        %v437 = vlaneseq
        %v438 = vshrl.u32 %v437, 7
        %v439 = vsub.s32 3, %v438
        %v440 = vrot.slane %v424, %v439
        %vm441 = vcmp.eq.s32.totalorder %v428, %v301
        %vm442 = vcmp.eq.s32.totalorder %v432, %v301
        %vm443 = vcmp.eq.s32.totalorder %v436, %v301
        %vm444 = vcmp.eq.s32.totalorder %v440, %v301
        %vm445 = vcmp.eq.s32.totalorder %v428, %v302
        %vm446 = vcmp.eq.s32.totalorder %v432, %v302
        %vm447 = vcmp.eq.s32.totalorder %v436, %v302
        %vm448 = vcmp.eq.s32.totalorder %v440, %v302
        %vm449 = vcmp.eq.s32.totalorder %v428, %v303
        %vm450 = vcmp.eq.s32.totalorder %v432, %v303
        %vm451 = vcmp.eq.s32.totalorder %v436, %v303
        %vm452 = vcmp.eq.s32.totalorder %v440, %v303
        %v454 = vlaneseq
        %v455 = vshrl.u32 %v454, 7
        %v456 = vsub.s32 0, %v455
        %v457 = vrot.slane %v411, %v456
        %v458 = vlaneseq
        %v459 = vshrl.u32 %v458, 7
        %v460 = vsub.s32 1, %v459
        %v461 = vrot.slane %v411, %v460
        %v462 = vlaneseq
        %v463 = vshrl.u32 %v462, 7
        %v464 = vsub.s32 2, %v463
        %v465 = vrot.slane %v411, %v464
        %v466 = vlaneseq
        %v467 = vshrl.u32 %v466, 7
        %v468 = vsub.s32 3, %v467
        %v469 = vrot.slane %v411, %v468
        %v474 = vsel %vm441, %v457, 0.0
        %v475 = vsel %vm442, %v461, 0.0
        %v476 = vsel %vm443, %v465, 0.0
        %v477 = vsel %vm444, %v469, 0.0
        %v478 = vsel %vm445, %v457, 0.0
        %v479 = vsel %vm446, %v461, 0.0
        %v480 = vsel %vm447, %v465, 0.0
        %v481 = vsel %vm448, %v469, 0.0
        %v482 = vsel %vm449, %v457, 0.0
        %v483 = vsel %vm450, %v461, 0.0
        %v484 = vsel %vm451, %v465, 0.0
        %v485 = vsel %vm452, %v469, 0.0
        %v486 = vadd.f32 %v394, %v474
        %v487 = vadd.f32 %v395, %v475
        %v488 = vadd.f32 %v396, %v476
        %v489 = vadd.f32 %v397, %v477
        %v490 = vadd.f32 %v398, %v478
        %v491 = vadd.f32 %v399, %v479
        %v492 = vadd.f32 %v400, %v480
        %v493 = vadd.f32 %v401, %v481
        %v494 = vadd.f32 %v402, %v482
        %v495 = vadd.f32 %v403, %v483
        %v496 = vadd.f32 %v404, %v484
        %v497 = vadd.f32 %v405, %v485
        %s498 = scalar_lea.vmem %s233, 2 [#allocation2]
        %v499 = vld [vmem:[%s498] ss:$8 sm:$0xf]
        %s500 = scalar_lea.vmem %s242, 2 [#allocation5]
        %v501 = vld [vmem:[%s500] ss:$8 sm:$0xf]
        %s502 = scalar_lea.vmem %s251, 2 [#allocation7]
        %v503 = vld [vmem:[%s502] ss:$8 sm:$0xf]
        %v504 = vmul.f32 %v499, %v499
        %v505 = vmul.f32 %v501, %v501
        %v506 = vadd.f32 %v504, %v505
        %v507 = vrsqrt.pop %v506
        %v508 = vmul.f32 %v506, %v507
        %vm509 = vcmp.eq.f32.partialorder %v506, inf
        %v510 = vsel %vm509, %v506, %v508
        %vm511 = vcmp.eq.f32.partialorder %v506, 0.0
        %v512 = vand.u32 %v506, 2147483648
        %v513 = vsel %vm511, %v512, %v510
        %v514 = vmul.f32 %v513, %v329
        %v515 = vfloor.f32 %v514
        %v516 = vcvt.f32.s32.to.zero.pseudo %v515
        %v517 = vlaneseq
        %v518 = vshrl.u32 %v517, 7
        %v519 = vsub.s32 0, %v518
        %v520 = vrot.slane %v516, %v519
        %v521 = vlaneseq
        %v522 = vshrl.u32 %v521, 7
        %v523 = vsub.s32 1, %v522
        %v524 = vrot.slane %v516, %v523
        %v525 = vlaneseq
        %v526 = vshrl.u32 %v525, 7
        %v527 = vsub.s32 2, %v526
        %v528 = vrot.slane %v516, %v527
        %v529 = vlaneseq
        %v530 = vshrl.u32 %v529, 7
        %v531 = vsub.s32 3, %v530
        %v532 = vrot.slane %v516, %v531
        %vm533 = vcmp.eq.s32.totalorder %v520, %v301
        %vm534 = vcmp.eq.s32.totalorder %v524, %v301
        %vm535 = vcmp.eq.s32.totalorder %v528, %v301
        %vm536 = vcmp.eq.s32.totalorder %v532, %v301
        %vm537 = vcmp.eq.s32.totalorder %v520, %v302
        %vm538 = vcmp.eq.s32.totalorder %v524, %v302
        %vm539 = vcmp.eq.s32.totalorder %v528, %v302
        %vm540 = vcmp.eq.s32.totalorder %v532, %v302
        %vm541 = vcmp.eq.s32.totalorder %v520, %v303
        %vm542 = vcmp.eq.s32.totalorder %v524, %v303
        %vm543 = vcmp.eq.s32.totalorder %v528, %v303
        %vm544 = vcmp.eq.s32.totalorder %v532, %v303
        %v546 = vlaneseq
        %v547 = vshrl.u32 %v546, 7
        %v548 = vsub.s32 0, %v547
        %v549 = vrot.slane %v503, %v548
        %v550 = vlaneseq
        %v551 = vshrl.u32 %v550, 7
        %v552 = vsub.s32 1, %v551
        %v553 = vrot.slane %v503, %v552
        %v554 = vlaneseq
        %v555 = vshrl.u32 %v554, 7
        %v556 = vsub.s32 2, %v555
        %v557 = vrot.slane %v503, %v556
        %v558 = vlaneseq
        %v559 = vshrl.u32 %v558, 7
        %v560 = vsub.s32 3, %v559
        %v561 = vrot.slane %v503, %v560
        %v566 = vsel %vm533, %v549, 0.0
        %v567 = vsel %vm534, %v553, 0.0
        %v568 = vsel %vm535, %v557, 0.0
        %v569 = vsel %vm536, %v561, 0.0
        %v570 = vsel %vm537, %v549, 0.0
        %v571 = vsel %vm538, %v553, 0.0
        %v572 = vsel %vm539, %v557, 0.0
        %v573 = vsel %vm540, %v561, 0.0
        %v574 = vsel %vm541, %v549, 0.0
        %v575 = vsel %vm542, %v553, 0.0
        %v576 = vsel %vm543, %v557, 0.0
        %v577 = vsel %vm544, %v561, 0.0
        %v578 = vadd.f32 %v486, %v566
        %v579 = vadd.f32 %v487, %v567
        %v580 = vadd.f32 %v488, %v568
        %v581 = vadd.f32 %v489, %v569
        %v582 = vadd.f32 %v490, %v570
        %v583 = vadd.f32 %v491, %v571
        %v584 = vadd.f32 %v492, %v572
        %v585 = vadd.f32 %v493, %v573
        %v586 = vadd.f32 %v494, %v574
        %v587 = vadd.f32 %v495, %v575
        %v588 = vadd.f32 %v496, %v576
        %v589 = vadd.f32 %v497, %v577
        %s590 = scalar_lea.vmem %s233, 3 [#allocation2]
        %v591 = vld [vmem:[%s590] ss:$8 sm:$0xf]
        %s592 = scalar_lea.vmem %s242, 3 [#allocation5]
        %v593 = vld [vmem:[%s592] ss:$8 sm:$0xf]
        %s594 = scalar_lea.vmem %s251, 3 [#allocation7]
        %v595 = vld [vmem:[%s594] ss:$8 sm:$0xf]
        %v596 = vmul.f32 %v591, %v591
        %v597 = vmul.f32 %v593, %v593
        %v598 = vadd.f32 %v596, %v597
        %v599 = vrsqrt.pop %v598
        %v600 = vmul.f32 %v598, %v599
        %vm601 = vcmp.eq.f32.partialorder %v598, inf
        %v602 = vsel %vm601, %v598, %v600
        %vm603 = vcmp.eq.f32.partialorder %v598, 0.0
        %v604 = vand.u32 %v598, 2147483648
        %v605 = vsel %vm603, %v604, %v602
        %v606 = vmul.f32 %v605, %v329
        %v607 = vfloor.f32 %v606
        %v608 = vcvt.f32.s32.to.zero.pseudo %v607
        %v609 = vlaneseq
        %v610 = vshrl.u32 %v609, 7
        %v611 = vsub.s32 0, %v610
        %v612 = vrot.slane %v608, %v611
        %v613 = vlaneseq
        %v614 = vshrl.u32 %v613, 7
        %v615 = vsub.s32 1, %v614
        %v616 = vrot.slane %v608, %v615
        %v617 = vlaneseq
        %v618 = vshrl.u32 %v617, 7
        %v619 = vsub.s32 2, %v618
        %v620 = vrot.slane %v608, %v619
        %v621 = vlaneseq
        %v622 = vshrl.u32 %v621, 7
        %v623 = vsub.s32 3, %v622
        %v624 = vrot.slane %v608, %v623
        %vm625 = vcmp.eq.s32.totalorder %v612, %v301
        %vm626 = vcmp.eq.s32.totalorder %v616, %v301
        %vm627 = vcmp.eq.s32.totalorder %v620, %v301
        %vm628 = vcmp.eq.s32.totalorder %v624, %v301
        %vm629 = vcmp.eq.s32.totalorder %v612, %v302
        %vm630 = vcmp.eq.s32.totalorder %v616, %v302
        %vm631 = vcmp.eq.s32.totalorder %v620, %v302
        %vm632 = vcmp.eq.s32.totalorder %v624, %v302
        %vm633 = vcmp.eq.s32.totalorder %v612, %v303
        %vm634 = vcmp.eq.s32.totalorder %v616, %v303
        %vm635 = vcmp.eq.s32.totalorder %v620, %v303
        %vm636 = vcmp.eq.s32.totalorder %v624, %v303
        %v638 = vlaneseq
        %v639 = vshrl.u32 %v638, 7
        %v640 = vsub.s32 0, %v639
        %v641 = vrot.slane %v595, %v640
        %v642 = vlaneseq
        %v643 = vshrl.u32 %v642, 7
        %v644 = vsub.s32 1, %v643
        %v645 = vrot.slane %v595, %v644
        %v646 = vlaneseq
        %v647 = vshrl.u32 %v646, 7
        %v648 = vsub.s32 2, %v647
        %v649 = vrot.slane %v595, %v648
        %v650 = vlaneseq
        %v651 = vshrl.u32 %v650, 7
        %v652 = vsub.s32 3, %v651
        %v653 = vrot.slane %v595, %v652
        %v658 = vsel %vm625, %v641, 0.0
        %v659 = vsel %vm626, %v645, 0.0
        %v660 = vsel %vm627, %v649, 0.0
        %v661 = vsel %vm628, %v653, 0.0
        %v662 = vsel %vm629, %v641, 0.0
        %v663 = vsel %vm630, %v645, 0.0
        %v664 = vsel %vm631, %v649, 0.0
        %v665 = vsel %vm632, %v653, 0.0
        %v666 = vsel %vm633, %v641, 0.0
        %v667 = vsel %vm634, %v645, 0.0
        %v668 = vsel %vm635, %v649, 0.0
        %v669 = vsel %vm636, %v653, 0.0
        %v670 = vadd.f32 %v578, %v658
        %v671 = vadd.f32 %v579, %v659
        %v672 = vadd.f32 %v580, %v660
        %v673 = vadd.f32 %v581, %v661
        %v674 = vadd.f32 %v582, %v662
        %v675 = vadd.f32 %v583, %v663
        %v676 = vadd.f32 %v584, %v664
        %v677 = vadd.f32 %v585, %v665
        %v678 = vadd.f32 %v586, %v666
        %v679 = vadd.f32 %v587, %v667
        %v680 = vadd.f32 %v588, %v668
        %v681 = vadd.f32 %v589, %v669
        %s682 = scalar_lea.vmem %s233, 4 [#allocation2]
        %v683 = vld [vmem:[%s682] ss:$8 sm:$0xf]
        %s684 = scalar_lea.vmem %s242, 4 [#allocation5]
        %v685 = vld [vmem:[%s684] ss:$8 sm:$0xf]
        %s686 = scalar_lea.vmem %s251, 4 [#allocation7]
        %v687 = vld [vmem:[%s686] ss:$8 sm:$0xf]
        %v688 = vmul.f32 %v683, %v683
        %v689 = vmul.f32 %v685, %v685
        %v690 = vadd.f32 %v688, %v689
        %v691 = vrsqrt.pop %v690
        %v692 = vmul.f32 %v690, %v691
        %vm693 = vcmp.eq.f32.partialorder %v690, inf
        %v694 = vsel %vm693, %v690, %v692
        %vm695 = vcmp.eq.f32.partialorder %v690, 0.0
        %v696 = vand.u32 %v690, 2147483648
        %v697 = vsel %vm695, %v696, %v694
        %v698 = vmul.f32 %v697, %v329
        %v699 = vfloor.f32 %v698
        %v700 = vcvt.f32.s32.to.zero.pseudo %v699
        %v701 = vlaneseq
        %v702 = vshrl.u32 %v701, 7
        %v703 = vsub.s32 0, %v702
        %v704 = vrot.slane %v700, %v703
        %v705 = vlaneseq
        %v706 = vshrl.u32 %v705, 7
        %v707 = vsub.s32 1, %v706
        %v708 = vrot.slane %v700, %v707
        %v709 = vlaneseq
        %v710 = vshrl.u32 %v709, 7
        %v711 = vsub.s32 2, %v710
        %v712 = vrot.slane %v700, %v711
        %v713 = vlaneseq
        %v714 = vshrl.u32 %v713, 7
        %v715 = vsub.s32 3, %v714
        %v716 = vrot.slane %v700, %v715
        %vm717 = vcmp.eq.s32.totalorder %v704, %v301
        %vm718 = vcmp.eq.s32.totalorder %v708, %v301
        %vm719 = vcmp.eq.s32.totalorder %v712, %v301
        %vm720 = vcmp.eq.s32.totalorder %v716, %v301
        %vm721 = vcmp.eq.s32.totalorder %v704, %v302
        %vm722 = vcmp.eq.s32.totalorder %v708, %v302
        %vm723 = vcmp.eq.s32.totalorder %v712, %v302
        %vm724 = vcmp.eq.s32.totalorder %v716, %v302
        %vm725 = vcmp.eq.s32.totalorder %v704, %v303
        %vm726 = vcmp.eq.s32.totalorder %v708, %v303
        %vm727 = vcmp.eq.s32.totalorder %v712, %v303
        %vm728 = vcmp.eq.s32.totalorder %v716, %v303
        %v730 = vlaneseq
        %v731 = vshrl.u32 %v730, 7
        %v732 = vsub.s32 0, %v731
        %v733 = vrot.slane %v687, %v732
        %v734 = vlaneseq
        %v735 = vshrl.u32 %v734, 7
        %v736 = vsub.s32 1, %v735
        %v737 = vrot.slane %v687, %v736
        %v738 = vlaneseq
        %v739 = vshrl.u32 %v738, 7
        %v740 = vsub.s32 2, %v739
        %v741 = vrot.slane %v687, %v740
        %v742 = vlaneseq
        %v743 = vshrl.u32 %v742, 7
        %v744 = vsub.s32 3, %v743
        %v745 = vrot.slane %v687, %v744
        %v750 = vsel %vm717, %v733, 0.0
        %v751 = vsel %vm718, %v737, 0.0
        %v752 = vsel %vm719, %v741, 0.0
        %v753 = vsel %vm720, %v745, 0.0
        %v754 = vsel %vm721, %v733, 0.0
        %v755 = vsel %vm722, %v737, 0.0
        %v756 = vsel %vm723, %v741, 0.0
        %v757 = vsel %vm724, %v745, 0.0
        %v758 = vsel %vm725, %v733, 0.0
        %v759 = vsel %vm726, %v737, 0.0
        %v760 = vsel %vm727, %v741, 0.0
        %v761 = vsel %vm728, %v745, 0.0
        %v762 = vadd.f32 %v670, %v750
        %v763 = vadd.f32 %v671, %v751
        %v764 = vadd.f32 %v672, %v752
        %v765 = vadd.f32 %v673, %v753
        %v766 = vadd.f32 %v674, %v754
        %v767 = vadd.f32 %v675, %v755
        %v768 = vadd.f32 %v676, %v756
        %v769 = vadd.f32 %v677, %v757
        %v770 = vadd.f32 %v678, %v758
        %v771 = vadd.f32 %v679, %v759
        %v772 = vadd.f32 %v680, %v760
        %v773 = vadd.f32 %v681, %v761
        %s774 = scalar_lea.vmem %s233, 5 [#allocation2]
        %v775 = vld [vmem:[%s774] ss:$8 sm:$0xf]
        %s776 = scalar_lea.vmem %s242, 5 [#allocation5]
        %v777 = vld [vmem:[%s776] ss:$8 sm:$0xf]
        %s778 = scalar_lea.vmem %s251, 5 [#allocation7]
        %v779 = vld [vmem:[%s778] ss:$8 sm:$0xf]
        %v780 = vmul.f32 %v775, %v775
        %v781 = vmul.f32 %v777, %v777
        %v782 = vadd.f32 %v780, %v781
        %v783 = vrsqrt.pop %v782
        %v784 = vmul.f32 %v782, %v783
        %vm785 = vcmp.eq.f32.partialorder %v782, inf
        %v786 = vsel %vm785, %v782, %v784
        %vm787 = vcmp.eq.f32.partialorder %v782, 0.0
        %v788 = vand.u32 %v782, 2147483648
        %v789 = vsel %vm787, %v788, %v786
        %v790 = vmul.f32 %v789, %v329
        %v791 = vfloor.f32 %v790
        %v792 = vcvt.f32.s32.to.zero.pseudo %v791
        %v793 = vlaneseq
        %v794 = vshrl.u32 %v793, 7
        %v795 = vsub.s32 0, %v794
        %v796 = vrot.slane %v792, %v795
        %v797 = vlaneseq
        %v798 = vshrl.u32 %v797, 7
        %v799 = vsub.s32 1, %v798
        %v800 = vrot.slane %v792, %v799
        %v801 = vlaneseq
        %v802 = vshrl.u32 %v801, 7
        %v803 = vsub.s32 2, %v802
        %v804 = vrot.slane %v792, %v803
        %v805 = vlaneseq
        %v806 = vshrl.u32 %v805, 7
        %v807 = vsub.s32 3, %v806
        %v808 = vrot.slane %v792, %v807
        %vm809 = vcmp.eq.s32.totalorder %v796, %v301
        %vm810 = vcmp.eq.s32.totalorder %v800, %v301
        %vm811 = vcmp.eq.s32.totalorder %v804, %v301
        %vm812 = vcmp.eq.s32.totalorder %v808, %v301
        %vm813 = vcmp.eq.s32.totalorder %v796, %v302
        %vm814 = vcmp.eq.s32.totalorder %v800, %v302
        %vm815 = vcmp.eq.s32.totalorder %v804, %v302
        %vm816 = vcmp.eq.s32.totalorder %v808, %v302
        %vm817 = vcmp.eq.s32.totalorder %v796, %v303
        %vm818 = vcmp.eq.s32.totalorder %v800, %v303
        %vm819 = vcmp.eq.s32.totalorder %v804, %v303
        %vm820 = vcmp.eq.s32.totalorder %v808, %v303
        %v822 = vlaneseq
        %v823 = vshrl.u32 %v822, 7
        %v824 = vsub.s32 0, %v823
        %v825 = vrot.slane %v779, %v824
        %v826 = vlaneseq
        %v827 = vshrl.u32 %v826, 7
        %v828 = vsub.s32 1, %v827
        %v829 = vrot.slane %v779, %v828
        %v830 = vlaneseq
        %v831 = vshrl.u32 %v830, 7
        %v832 = vsub.s32 2, %v831
        %v833 = vrot.slane %v779, %v832
        %v834 = vlaneseq
        %v835 = vshrl.u32 %v834, 7
        %v836 = vsub.s32 3, %v835
        %v837 = vrot.slane %v779, %v836
        %v842 = vsel %vm809, %v825, 0.0
        %v843 = vsel %vm810, %v829, 0.0
        %v844 = vsel %vm811, %v833, 0.0
        %v845 = vsel %vm812, %v837, 0.0
        %v846 = vsel %vm813, %v825, 0.0
        %v847 = vsel %vm814, %v829, 0.0
        %v848 = vsel %vm815, %v833, 0.0
        %v849 = vsel %vm816, %v837, 0.0
        %v850 = vsel %vm817, %v825, 0.0
        %v851 = vsel %vm818, %v829, 0.0
        %v852 = vsel %vm819, %v833, 0.0
        %v853 = vsel %vm820, %v837, 0.0
        %v854 = vadd.f32 %v762, %v842
        %v855 = vadd.f32 %v763, %v843
        %v856 = vadd.f32 %v764, %v844
        %v857 = vadd.f32 %v765, %v845
        %v858 = vadd.f32 %v766, %v846
        %v859 = vadd.f32 %v767, %v847
        %v860 = vadd.f32 %v768, %v848
        %v861 = vadd.f32 %v769, %v849
        %v862 = vadd.f32 %v770, %v850
        %v863 = vadd.f32 %v771, %v851
        %v864 = vadd.f32 %v772, %v852
        %v865 = vadd.f32 %v773, %v853
        %s866 = scalar_lea.vmem %s233, 6 [#allocation2]
        %v867 = vld [vmem:[%s866] ss:$8 sm:$0xf]
        %s868 = scalar_lea.vmem %s242, 6 [#allocation5]
        %v869 = vld [vmem:[%s868] ss:$8 sm:$0xf]
        %s870 = scalar_lea.vmem %s251, 6 [#allocation7]
        %v871 = vld [vmem:[%s870] ss:$8 sm:$0xf]
        %v872 = vmul.f32 %v867, %v867
        %v873 = vmul.f32 %v869, %v869
        %v874 = vadd.f32 %v872, %v873
        %v875 = vrsqrt.pop %v874
        %v876 = vmul.f32 %v874, %v875
        %vm877 = vcmp.eq.f32.partialorder %v874, inf
        %v878 = vsel %vm877, %v874, %v876
        %vm879 = vcmp.eq.f32.partialorder %v874, 0.0
        %v880 = vand.u32 %v874, 2147483648
        %v881 = vsel %vm879, %v880, %v878
        %v882 = vmul.f32 %v881, %v329
        %v883 = vfloor.f32 %v882
        %v884 = vcvt.f32.s32.to.zero.pseudo %v883
        %v885 = vlaneseq
        %v886 = vshrl.u32 %v885, 7
        %v887 = vsub.s32 0, %v886
        %v888 = vrot.slane %v884, %v887
        %v889 = vlaneseq
        %v890 = vshrl.u32 %v889, 7
        %v891 = vsub.s32 1, %v890
        %v892 = vrot.slane %v884, %v891
        %v893 = vlaneseq
        %v894 = vshrl.u32 %v893, 7
        %v895 = vsub.s32 2, %v894
        %v896 = vrot.slane %v884, %v895
        %v897 = vlaneseq
        %v898 = vshrl.u32 %v897, 7
        %v899 = vsub.s32 3, %v898
        %v900 = vrot.slane %v884, %v899
        %vm901 = vcmp.eq.s32.totalorder %v888, %v301
        %vm902 = vcmp.eq.s32.totalorder %v892, %v301
        %vm903 = vcmp.eq.s32.totalorder %v896, %v301
        %vm904 = vcmp.eq.s32.totalorder %v900, %v301
        %vm905 = vcmp.eq.s32.totalorder %v888, %v302
        %vm906 = vcmp.eq.s32.totalorder %v892, %v302
        %vm907 = vcmp.eq.s32.totalorder %v896, %v302
        %vm908 = vcmp.eq.s32.totalorder %v900, %v302
        %vm909 = vcmp.eq.s32.totalorder %v888, %v303
        %vm910 = vcmp.eq.s32.totalorder %v892, %v303
        %vm911 = vcmp.eq.s32.totalorder %v896, %v303
        %vm912 = vcmp.eq.s32.totalorder %v900, %v303
        %v914 = vlaneseq
        %v915 = vshrl.u32 %v914, 7
        %v916 = vsub.s32 0, %v915
        %v917 = vrot.slane %v871, %v916
        %v918 = vlaneseq
        %v919 = vshrl.u32 %v918, 7
        %v920 = vsub.s32 1, %v919
        %v921 = vrot.slane %v871, %v920
        %v922 = vlaneseq
        %v923 = vshrl.u32 %v922, 7
        %v924 = vsub.s32 2, %v923
        %v925 = vrot.slane %v871, %v924
        %v926 = vlaneseq
        %v927 = vshrl.u32 %v926, 7
        %v928 = vsub.s32 3, %v927
        %v929 = vrot.slane %v871, %v928
        %v934 = vsel %vm901, %v917, 0.0
        %v935 = vsel %vm902, %v921, 0.0
        %v936 = vsel %vm903, %v925, 0.0
        %v937 = vsel %vm904, %v929, 0.0
        %v938 = vsel %vm905, %v917, 0.0
        %v939 = vsel %vm906, %v921, 0.0
        %v940 = vsel %vm907, %v925, 0.0
        %v941 = vsel %vm908, %v929, 0.0
        %v942 = vsel %vm909, %v917, 0.0
        %v943 = vsel %vm910, %v921, 0.0
        %v944 = vsel %vm911, %v925, 0.0
        %v945 = vsel %vm912, %v929, 0.0
        %v946 = vadd.f32 %v854, %v934
        %v947 = vadd.f32 %v855, %v935
        %v948 = vadd.f32 %v856, %v936
        %v949 = vadd.f32 %v857, %v937
        %v950 = vadd.f32 %v858, %v938
        %v951 = vadd.f32 %v859, %v939
        %v952 = vadd.f32 %v860, %v940
        %v953 = vadd.f32 %v861, %v941
        %v954 = vadd.f32 %v862, %v942
        %v955 = vadd.f32 %v863, %v943
        %v956 = vadd.f32 %v864, %v944
        %v957 = vadd.f32 %v865, %v945
        %s958 = scalar_lea.vmem %s233, 7 [#allocation2]
        %v959 = vld [vmem:[%s958] ss:$8 sm:$0xf]
        %s960 = scalar_lea.vmem %s242, 7 [#allocation5]
        %v961 = vld [vmem:[%s960] ss:$8 sm:$0xf]
        %s962 = scalar_lea.vmem %s251, 7 [#allocation7]
        %v963 = vld [vmem:[%s962] ss:$8 sm:$0xf]
        %v964 = vmul.f32 %v959, %v959
        %v965 = vmul.f32 %v961, %v961
        %v966 = vadd.f32 %v964, %v965
        %v967 = vrsqrt.pop %v966
        %v968 = vmul.f32 %v966, %v967
        %vm969 = vcmp.eq.f32.partialorder %v966, inf
        %v970 = vsel %vm969, %v966, %v968
        %vm971 = vcmp.eq.f32.partialorder %v966, 0.0
        %v972 = vand.u32 %v966, 2147483648
        %v973 = vsel %vm971, %v972, %v970
        %v974 = vmul.f32 %v973, %v329
        %v975 = vfloor.f32 %v974
        %v976 = vcvt.f32.s32.to.zero.pseudo %v975
        %v977 = vlaneseq
        %v978 = vshrl.u32 %v977, 7
        %v979 = vsub.s32 0, %v978
        %v980 = vrot.slane %v976, %v979
        %v981 = vlaneseq
        %v982 = vshrl.u32 %v981, 7
        %v983 = vsub.s32 1, %v982
        %v984 = vrot.slane %v976, %v983
        %v985 = vlaneseq
        %v986 = vshrl.u32 %v985, 7
        %v987 = vsub.s32 2, %v986
        %v988 = vrot.slane %v976, %v987
        %v989 = vlaneseq
        %v990 = vshrl.u32 %v989, 7
        %v991 = vsub.s32 3, %v990
        %v992 = vrot.slane %v976, %v991
        %vm993 = vcmp.eq.s32.totalorder %v980, %v301
        %vm994 = vcmp.eq.s32.totalorder %v984, %v301
        %vm995 = vcmp.eq.s32.totalorder %v988, %v301
        %vm996 = vcmp.eq.s32.totalorder %v992, %v301
        %vm997 = vcmp.eq.s32.totalorder %v980, %v302
        %vm998 = vcmp.eq.s32.totalorder %v984, %v302
        %vm999 = vcmp.eq.s32.totalorder %v988, %v302
        %vm1000 = vcmp.eq.s32.totalorder %v992, %v302
        %vm1001 = vcmp.eq.s32.totalorder %v980, %v303
        %vm1002 = vcmp.eq.s32.totalorder %v984, %v303
        %vm1003 = vcmp.eq.s32.totalorder %v988, %v303
        %vm1004 = vcmp.eq.s32.totalorder %v992, %v303
        %v1006 = vlaneseq
        %v1007 = vshrl.u32 %v1006, 7
        %v1008 = vsub.s32 0, %v1007
        %v1009 = vrot.slane %v963, %v1008
        %v1010 = vlaneseq
        %v1011 = vshrl.u32 %v1010, 7
        %v1012 = vsub.s32 1, %v1011
        %v1013 = vrot.slane %v963, %v1012
        %v1014 = vlaneseq
        %v1015 = vshrl.u32 %v1014, 7
        %v1016 = vsub.s32 2, %v1015
        %v1017 = vrot.slane %v963, %v1016
        %v1018 = vlaneseq
        %v1019 = vshrl.u32 %v1018, 7
        %v1020 = vsub.s32 3, %v1019
        %v1021 = vrot.slane %v963, %v1020
        %v1026 = vsel %vm993, %v1009, 0.0
        %v1027 = vsel %vm994, %v1013, 0.0
        %v1028 = vsel %vm995, %v1017, 0.0
        %v1029 = vsel %vm996, %v1021, 0.0
        %v1030 = vsel %vm997, %v1009, 0.0
        %v1031 = vsel %vm998, %v1013, 0.0
        %v1032 = vsel %vm999, %v1017, 0.0
        %v1033 = vsel %vm1000, %v1021, 0.0
        %v1034 = vsel %vm1001, %v1009, 0.0
        %v1035 = vsel %vm1002, %v1013, 0.0
        %v1036 = vsel %vm1003, %v1017, 0.0
        %v1037 = vsel %vm1004, %v1021, 0.0
        %v1038 = vadd.f32 %v946, %v1026
        %v1039 = vadd.f32 %v947, %v1027
        %v1040 = vadd.f32 %v948, %v1028
        %v1041 = vadd.f32 %v949, %v1029
        %v1042 = vadd.f32 %v950, %v1030
        %v1043 = vadd.f32 %v951, %v1031
        %v1044 = vadd.f32 %v952, %v1032
        %v1045 = vadd.f32 %v953, %v1033
        %v1046 = vadd.f32 %v954, %v1034
        %v1047 = vadd.f32 %v955, %v1035
        %v1048 = vadd.f32 %v956, %v1036
        %v1049 = vadd.f32 %v957, %v1037
        %1050 = vst [vmem:[%s283] sm:$0xff] %v1038
        %1051 = vst [vmem:[%s283 + $0x8] sm:$0xff] %v1039
        %1052 = vst [vmem:[%s283 + $0x10] sm:$0xff] %v1040
        %1053 = vst [vmem:[%s283 + $0x18] sm:$0xff] %v1041
        %1054 = vst [vmem:[%s283 + $0x20] sm:$0xff] %v1042
        %1055 = vst [vmem:[%s283 + $0x28] sm:$0xff] %v1043
        %1056 = vst [vmem:[%s283 + $0x30] sm:$0xff] %v1044
        %1057 = vst [vmem:[%s283 + $0x38] sm:$0xff] %v1045
        %1058 = vst [vmem:[%s283 + $0x40] sm:$0xff] %v1046
        %1059 = vst [vmem:[%s283 + $0x48] sm:$0xff] %v1047
        %1060 = vst [vmem:[%s283 + $0x50] sm:$0xff] %v1048
        %1061 = vst [vmem:[%s283 + $0x58] sm:$0xff] %v1049
        %s1062 = sand.u32 %s127, 1
        %s1063 = scalar_lea.sflag [#allocation4], %s1062
        %s1064 = sand.u32 %s127, 1
        %s1065 = smul.addr %s1064, 96
        %s1066 = scalar_lea.vmem [#allocation8], %s1065
        // Predicated region
        $region49: #{tpu_custom_call.1} parent=31 // pred_check
          %p1067 = pneg %p137
        $region50: #{tpu_custom_call.1} parent=31 // pred_check_branch
          %1069 = sbr.rel (%p1067) target = $region52
        $region51: #{tpu_custom_call.1} parent=31 // pred_region
          %s1071 = ssub.s32 1536, 1536
          %1072 = vsyncadd %s1063, %s1071
          %s1073 = smul.addr %s27, 12
          %s1074 = smul.addr %s1073, 128
          %s1075 = scalar_lea.hbm %s3, %s1074
          %s1076 = sshll.u32 %s1066, 4
          %s1077 = int_to_ptr.vmem [resolvable:$true] %s1076
          %1082 = dma.vmem_to_hbm [thread:$0]  %s1077, 1536, %s1075, %s1063, 512, 512, 32
        $region52: #{tpu_custom_call.1} parent=31 // pred_fallthru
          _
      $region32: #{tpu_custom_call.1} parent=5 // pred_fallthru
        _
      %p1083 = scmp.le.s32.totalorder 2, %s18
      // Predicated region
      $region53: #{tpu_custom_call.1} parent=5 // pred_check
        %p1084 = pneg %p1083
      $region54: #{tpu_custom_call.1} parent=5 // pred_check_branch
        %1086 = sbr.rel (%p1084) target = $region56
      $region55: #{tpu_custom_call.1} parent=5 // pred_region
        %s1087 = ssub.s32 %s18, 2
        // Predicated region
        $region57: #{tpu_custom_call.1} parent=55 // pred_check
          %p1088 = pneg %p143
        $region58: #{tpu_custom_call.1} parent=55 // pred_check_branch
          %1090 = sbr.rel (%p1088) target = $region60
        $region59: #{tpu_custom_call.1} parent=55 // pred_region
          %s1091 = sand.u32 %s128, 1
          %s1092 = scalar_lea.sflag [#allocation4], %s1091
          %s1093 = sand.u32 %s128, 1
          %s1094 = smul.addr %s1093, 96
          %s1095 = scalar_lea.vmem [#allocation8], %s1094
          %1096 = dma.done %s1092, 1536
        $region60: #{tpu_custom_call.1} parent=55 // pred_fallthru
          _
      $region56: #{tpu_custom_call.1} parent=5 // pred_fallthru
        _
    $region6: #{tpu_custom_call.1} parent=1 // loop_footer
      %s22 = sadd.s32 1, %s18
    $region7: #{tpu_custom_call.1} parent=1 // loop_footer_branch
      %17 = sbr.rel target = $region3
    $region8: #{tpu_custom_call.1} parent=1 // loop_exit
      _
    %1097 = vsyncpa [#allocation3], 1
    %s1098 = scalar_lea.sflag [#allocation3], 1
    %1099 = vsyncpa %s1098, 1
    %1100 = vsyncpa [#allocation6], 1
    %s1101 = scalar_lea.sflag [#allocation6], 1
    %1102 = vsyncpa %s1101, 1
    %1103 = vsyncpa [#allocation4], 1
    %s1104 = scalar_lea.sflag [#allocation4], 1
    %1105 = vsyncpa %s1104, 1

</llo_original>
